<compile_context>
chip_gen: v7x
topology: tpu7x:2x2x1
jax: 0.10.0
libtpu: 0.0.40
codegen_flags: <defaults>
</compile_context>

<pallas_src>
import jax
import jax.numpy as jnp
from jax.experimental import pallas as pl
from jax.experimental.pallas import tpu as pltpu


_LANE = 128
_NEG_INF = -1e30  # finite "-inf" for padded class logits (exp underflows to 0)


def _export_kernel(x_ref, wt_ref, b_ref, id_ref, prob_ref):
    """One (batch b, width-tile wi) grid step.

    x_ref   : (1, C, H, TW) f32   image slab in native NCHW layout
    wt_ref  : (Cc, F)       bf16  transposed, class-padded head weight (F = C*H)
    b_ref   : (Cc, 1)       f32   class bias; padded classes = -1e30
    id_ref  : (1, 1, TW)    int32 argmax class per time step
    prob_ref: (1, 1, TW)    f32   max softmax probability per time step
    """
    _, C, H, TW = x_ref.shape
    F = C * H
    Cc = wt_ref.shape[0]

    # (1, C, H, TW) -> (F, TW); layout-free because H is padded to the sublane
    # tile of the input dtype in the wrapper.  Cast to bf16 for the MXU here
    # (no separate f32->bf16 HBM pass in the wrapper).
    x = x_ref[...].reshape(F, TW).astype(jnp.bfloat16)

    # MXU: logits[class, t] = sum_f wt[class, f] * x[f, t], f32 accumulate.
    logits = jnp.dot(wt_ref[...], x, preferred_element_type=jnp.float32)
    logits = logits + b_ref[...]                       # (Cc, TW), lane broadcast

    # Single class-axis max reused for the stable-softmax shift and the argmax.
    m = jnp.max(logits, axis=0, keepdims=True)         # (1, TW)
    e = jnp.exp(logits - m)                            # (Cc, TW)
    denom = jnp.sum(e, axis=0, keepdims=True)          # (1, TW)

    # max(softmax) == exp(m - m) / denom == 1 / denom (no probs materialized).
    prob_ref[...] = pl.reciprocal(denom, approx=False).reshape(1, 1, TW)

    # First-occurrence argmax (torch.max semantics): smallest class index whose
    # logit equals the max.  Padded classes sit at -1e30 and can never win.
    # (iota/where/min is used instead of jnp.argmax for robust Mosaic lowering
    # of an index reduction along the sublane axis.)
    cls = jax.lax.broadcasted_iota(jnp.int32, (Cc, TW), 0)
    cand = jnp.where(logits == m, cls, jnp.int32(Cc))
    id_ref[...] = jnp.min(cand, axis=0, keepdims=True).reshape(1, 1, TW)


def _vmem_capacity_bytes():
    """Physical per-core VMEM; conservative 64 MiB (v7x) fallback."""
    try:
        info = pltpu.get_tpu_info()
        cap = getattr(info, "vmem_capacity_bytes", None)
        if cap:
            return int(cap)
    except Exception:
        pass
    return 64 * 1024 * 1024


def _pick_width_tile(Wp, F, Cc, budget_bytes):
    """Largest 128-lane-multiple width tile dividing Wp that fits the VMEM budget."""
    for tw in (1024, 512, 256, 128):
        if Wp % tw:
            continue
        x_blk = 2 * F * tw * 4                # double-buffered f32 input blocks
        w_res = Cc * F * 2                    # resident bf16 weight
        tmps = (3 * Cc * 4 + F * 2) * tw      # logits/e/cand f32 + bf16 x copy
        outs = 2 * 2 * tw * 8                 # double-buffered (id, prob) blocks
        if x_blk + w_res + tmps + outs <= budget_bytes:
            return tw
    return _LANE                              # Wp is always a multiple of 128


def _resident_spec(shape, nbytes):
    """BlockSpec for an operand that stays resident (constant index_map).

    Single-buffers it when large enough for the VMEM saving to matter; small
    operands keep the default (proven) pipelining path.
    """
    if nbytes >= (1 << 20):
        try:
            return pl.BlockSpec(shape, lambda bi, wi: (0, 0),
                                pipeline_mode=pl.Buffered(1))
        except Exception:
            pass
    return pl.BlockSpec(shape, lambda bi, wi: (0, 0))


def export_model_forward(x_nchw, text, w, b):
    """Mirrors ExportModel.forward(input, text).

    x_nchw : (B, C, H, W) float32   image input (NCHW, as in PyTorch)
    text   : (B, T) int32           decoder tokens; unused on the CTC path
    w      : (C*H, num_classes)     synthetic CTC head weight
    b      : (1, num_classes)       synthetic CTC head bias
    returns: (sequence_id int32 (B, T), sequence_prob float32 (B, T)), T = W
    """
    # TODO(synk): `text` is only consumed by attention-based ocr_model variants;
    # the CTC export path ignores it (kept for interface parity).
    del text
    B, C, H, W = x_nchw.shape
    W_out = W
    num_classes = w.shape[1]

    # Pad H to the input dtype's sublane tile so the in-kernel
    # (1, C, H, TW) -> (C*H, TW) reshape is layout-free; pad the head weight's
    # (C, H) rows to match (zero rows -> identical logits).
    sublane = 32 // x_nchw.dtype.itemsize
    Hp = pl.cdiv(H, sublane) * sublane
    if Hp != H:
        x_nchw = jnp.pad(x_nchw, ((0, 0), (0, 0), (0, Hp - H), (0, 0)))
        w = jnp.pad(w.reshape(C, H, num_classes),
                    ((0, 0), (0, Hp - H), (0, 0))).reshape(C * Hp, num_classes)
        H = Hp

    # Pad W up to a multiple of 128 so every width tile is lane-dense
    # (unmasked stores, full vregs) and the width grid axis pipelines / shards.
    Wp = pl.cdiv(W, _LANE) * _LANE
    if Wp != W:
        x_nchw = jnp.pad(x_nchw, ((0, 0), (0, 0), (0, 0), (0, Wp - W)))

    F = C * H
    Cc = max(_LANE, pl.cdiv(num_classes, _LANE) * _LANE)   # lane-padded classes

    cap = _vmem_capacity_bytes()
    TW = _pick_width_tile(Wp, F, Cc, budget_bytes=int(0.45 * cap))
    NW = Wp // TW

    # Weight is transposed + class-padded (bf16 for the MXU); padded-class bias
    # is -1e30 so those rows never win max/argmax and exp underflows to 0.
    wt = jnp.zeros((Cc, F), jnp.bfloat16).at[:num_classes, :].set(
        w.T.astype(jnp.bfloat16))
    bias = jnp.full((Cc, 1), _NEG_INF, jnp.float32).at[:num_classes, 0].set(
        b.reshape(-1).astype(jnp.float32))

    ids, probs = pl.pallas_call(
        _export_kernel,
        out_shape=(
            jax.ShapeDtypeStruct((B, 1, Wp), jnp.int32),
            jax.ShapeDtypeStruct((B, 1, Wp), jnp.float32),
        ),
        grid=(B, NW),
        in_specs=[
            pl.BlockSpec((1, C, H, TW), lambda bi, wi: (bi, 0, 0, wi)),
            _resident_spec((Cc, F), Cc * F * 2),   # resident weight
            _resident_spec((Cc, 1), Cc * 4),       # resident bias
        ],
        out_specs=(
            pl.BlockSpec((1, 1, TW), lambda bi, wi: (bi, 0, wi)),
            pl.BlockSpec((1, 1, TW), lambda bi, wi: (bi, 0, wi)),
        ),
        compiler_params=pltpu.CompilerParams(
            dimension_semantics=("parallel", "parallel"),
            vmem_limit_bytes=int(0.70 * cap)),
    )(x_nchw, wt, bias)

    return ids[:, 0, :W_out], probs[:, 0, :W_out]


def _reference_forward(x_nchw, w, b):
    """Pure-JAX reference (same bf16 matmul inputs, f32 epilogue)."""
    B, C, H, W = x_nchw.shape
    x2d = jnp.transpose(x_nchw.astype(jnp.bfloat16),
                        (0, 3, 1, 2)).reshape(B * W, C * H)
    logits = jnp.dot(x2d, w.astype(jnp.bfloat16),
                     preferred_element_type=jnp.float32) + b.astype(jnp.float32)
    probs = jax.nn.softmax(logits, axis=-1)
    seq_prob = jnp.max(probs, axis=-1).reshape(B, W)
    seq_id = jnp.argmax(probs, axis=-1).astype(jnp.int32).reshape(B, W)
    return seq_id, seq_prob


if __name__ == "__main__":
    key = jax.random.PRNGKey(0)
    k_x, k_w, k_b, k_t = jax.random.split(key, 4)

    # Small OCR-export-like shapes: batch=2, channels=4, H=16, W=16
    # -> sequence length T = 16, feature dim F = 64, 32 classes.
    B, C, H, W = 2, 4, 16, 16
    num_classes = 32
    F = C * H

    x = jax.random.normal(k_x, (B, C, H, W), dtype=jnp.float32)
    text = jax.random.randint(k_t, (B, W), 0, num_classes, dtype=jnp.int32)
    w = (jax.random.normal(k_w, (F, num_classes), dtype=jnp.float32)
         * (1.0 / jnp.sqrt(F)))
    b = jax.random.normal(k_b, (1, num_classes), dtype=jnp.float32) * 0.01

    seq_id, seq_prob = jax.jit(export_model_forward)(x, text, w, b)
    jax.block_until_ready((seq_id, seq_prob))

    ref_id, ref_prob = _reference_forward(x, w, b)
    assert seq_id.dtype == jnp.int32
    assert seq_prob.dtype == jnp.float32
    assert seq_id.shape == (B, W) and seq_prob.shape == (B, W)
    assert bool(jnp.all(seq_id == ref_id))
    assert float(jnp.max(jnp.abs(seq_prob - ref_prob))) < 1e-5

    print("KERNEL_OK")
</pallas_src>

<mosaic_0001>
module attributes {stable_mosaic.version = 11 : i64} {
  func.func @_export_kernel(%arg0: i32, %arg1: i32, %arg2: memref<1x4x16x128xf32, #tpu.memory_space<vmem>>, %arg3: memref<128x64xbf16, #tpu.memory_space<vmem>>, %arg4: memref<128x1xf32, #tpu.memory_space<vmem>>, %arg5: memref<1x1x128xi32, #tpu.memory_space<vmem>>, %arg6: memref<1x1x128xf32, #tpu.memory_space<vmem>>) attributes {dimension_semantics = [#tpu.dimension_semantics<parallel>, #tpu.dimension_semantics<parallel>], iteration_bounds = array<i64: 2, 1>, scalar_prefetch = 0 : i64, scratch_operands = 0 : i64, tpu.core_type = #tpu.core_type<tc>, window_params = [{transform_indices = @transform_0, window_bounds = array<i64: 1, 4, 16, 128>}, {pipeline_mode = #tpu.pipeline_mode<synchronous>, transform_indices = @transform_1, window_bounds = array<i64: 128, 64>}, {pipeline_mode = #tpu.pipeline_mode<synchronous>, transform_indices = @transform_2, window_bounds = array<i64: 128, 1>}, {transform_indices = @transform_3, window_bounds = array<i64: 1, 1, 128>}, {transform_indices = @transform_4, window_bounds = array<i64: 1, 1, 128>}]} {
    %c0 = arith.constant 0 : index
    %c0_0 = arith.constant 0 : index
    %c0_1 = arith.constant 0 : index
    %c0_2 = arith.constant 0 : index
    %0 = vector.load %arg2[%c0, %c0_0, %c0_1, %c0_2] : memref<1x4x16x128xf32, #tpu.memory_space<vmem>>, vector<1x4x16x128xf32>
    %1 = vector.shape_cast %0 : vector<1x4x16x128xf32> to vector<64x128xf32>
    %2 = arith.truncf %1 : vector<64x128xf32> to vector<64x128xbf16>
    %c0_3 = arith.constant 0 : index
    %c0_4 = arith.constant 0 : index
    %3 = vector.load %arg3[%c0_3, %c0_4] : memref<128x64xbf16, #tpu.memory_space<vmem>>, vector<128x64xbf16>
    %cst = arith.constant dense<0.000000e+00> : vector<128x128xf32>
    %4 = tpu.matmul %3, %2, %cst {dimension_numbers = #tpu.dot_dimension_numbers<[1], [0], [0], [1], [0, 0, 1, 1], [], []>} : vector<128x64xbf16>, vector<64x128xbf16>, vector<128x128xf32> -> vector<128x128xf32>
    %c0_5 = arith.constant 0 : index
    %c0_6 = arith.constant 0 : index
    %5 = vector.load %arg4[%c0_5, %c0_6] : memref<128x1xf32, #tpu.memory_space<vmem>>, vector<128x1xf32>
    %6 = vector.broadcast %5 : vector<128x1xf32> to vector<128x128xf32>
    %7 = arith.addf %4, %6 : vector<128x128xf32>
    %cst_7 = arith.constant dense<0xFF800000> : vector<128xf32>
    %8 = vector.multi_reduction <maximumf>, %7, %cst_7 [0] : vector<128x128xf32> to vector<128xf32>
    %9 = vector.shape_cast %8 : vector<128xf32> to vector<1x128xf32>
    %10 = vector.broadcast %9 : vector<1x128xf32> to vector<128x128xf32>
    %11 = arith.subf %7, %10 : vector<128x128xf32>
    %12 = math.exp %11 : vector<128x128xf32>
    %cst_8 = arith.constant dense<0.000000e+00> : vector<128xf32>
    %13 = vector.multi_reduction <add>, %12, %cst_8 [0] : vector<128x128xf32> to vector<128xf32>
    %14 = vector.shape_cast %13 : vector<128xf32> to vector<1x128xf32>
    %15 = tpu.reciprocal %14 : vector<1x128xf32> -> vector<1x128xf32>
    %16 = vector.shape_cast %15 : vector<1x128xf32> to vector<1x1x128xf32>
    %c0_9 = arith.constant 0 : index
    %c0_10 = arith.constant 0 : index
    %c0_11 = arith.constant 0 : index
    %17 = vector.load %arg6[%c0_9, %c0_10, %c0_11] : memref<1x1x128xf32, #tpu.memory_space<vmem>>, vector<1x1x128xf32>
    tpu.vector_store %arg6[%c0_9, %c0_10, %c0_11], %16 {strides = array<i32>} : memref<1x1x128xf32, #tpu.memory_space<vmem>>, vector<1x1x128xf32>,
    %18 = tpu.iota {dimensions = array<i32: 0>} : vector<128x128xi32>
    %19 = vector.broadcast %9 : vector<1x128xf32> to vector<128x128xf32>
    %20 = arith.cmpf oeq, %7, %19 : vector<128x128xf32>
    %c128_i32 = arith.constant 128 : i32
    %21 = vector.broadcast %c128_i32 : i32 to vector<128x128xi32>
    %22 = arith.select %20, %18, %21 : vector<128x128xi1>, vector<128x128xi32>
    %cst_12 = arith.constant dense<2147483647> : vector<128xi32>
    %23 = vector.multi_reduction <minsi>, %22, %cst_12 [0] : vector<128x128xi32> to vector<128xi32>
    %24 = vector.shape_cast %23 : vector<128xi32> to vector<1x128xi32>
    %25 = vector.shape_cast %24 : vector<1x128xi32> to vector<1x1x128xi32>
    %c0_13 = arith.constant 0 : index
    %c0_14 = arith.constant 0 : index
    %c0_15 = arith.constant 0 : index
    %26 = vector.load %arg5[%c0_13, %c0_14, %c0_15] : memref<1x1x128xi32, #tpu.memory_space<vmem>>, vector<1x1x128xi32>
    tpu.vector_store %arg5[%c0_13, %c0_14, %c0_15], %25 {strides = array<i32>} : memref<1x1x128xi32, #tpu.memory_space<vmem>>, vector<1x1x128xi32>,
    return
  }
  func.func @transform_0(%arg0: i32, %arg1: i32) -> (i32, i32, i32, i32) {
    %c0_i32 = arith.constant 0 : i32
    %c0_i32_0 = arith.constant 0 : i32
    %c0_i32_1 = arith.constant 0 : i32
    return %arg0, %c0_i32, %c0_i32_0, %arg1 : i32, i32, i32, i32
  }
  func.func @transform_1(%arg0: i32, %arg1: i32) -> (i32, i32) {
    %c0_i32 = arith.constant 0 : i32
    %c0_i32_0 = arith.constant 0 : i32
    %c0_i32_1 = arith.constant 0 : i32
    return %c0_i32, %c0_i32_0 : i32, i32
  }
  func.func @transform_2(%arg0: i32, %arg1: i32) -> (i32, i32) {
    %c0_i32 = arith.constant 0 : i32
    %c0_i32_0 = arith.constant 0 : i32
    %c0_i32_1 = arith.constant 0 : i32
    return %c0_i32, %c0_i32_0 : i32, i32
  }
  func.func @transform_3(%arg0: i32, %arg1: i32) -> (i32, i32, i32) {
    %c0_i32 = arith.constant 0 : i32
    %c0_i32_0 = arith.constant 0 : i32
    return %arg0, %c0_i32, %arg1 : i32, i32, i32
  }
  func.func @transform_4(%arg0: i32, %arg1: i32) -> (i32, i32, i32) {
    %c0_i32 = arith.constant 0 : i32
    %c0_i32_0 = arith.constant 0 : i32
    return %arg0, %c0_i32, %arg1 : i32, i32, i32
  }
}

</mosaic_0001>

<llo_original>
// kernel: export_model_forward.1
$region0: #{export_model_forward.1}
  #allocation0 [shape = 'u32[]', space=smem, size = 0x4, offset = 0x4, fixed_abs, tag = 'smem constant byte address 0x4 - core index']
  #allocation1 [shape = 'u32[144,128]{1,0:T(1,128)}', space=vmem, size = 0x12000, scoped, tag = 'internal scratch']
  %s0 = inlined_call_operand.vmem [shape: f32[2,4,16,128], index: 0, kind: input, shape index: {}]
  %s1 = inlined_call_operand.vmem [shape: bf16[128,64], index: 1, kind: input, shape index: {}]
  %s2 = inlined_call_operand.vmem [shape: f32[128,1], index: 2, kind: input, shape index: {}]
  %s3 = inlined_call_operand.hbm [shape: s32[2,1,128], index: 3, kind: output, shape index: {0}]
  %s4 = inlined_call_operand.hbm [shape: f32[2,1,128], index: 4, kind: output, shape index: {1}]
  %5 = xla_tuple %s3, %s4
  %s6 = sld [smem:[#allocation0]]
  $region53: #{export_model_forward.1} parent=0
    _
  %s8 = ssub.s32 1, %s6
  %s9 = scalar_select 0, %s8, %s6
  $region1: #{export_model_forward.1} parent=0
    #allocation2 [shape = 'u8[1024]{0}', space=vmem, size = 0x400, scoped, tag = 'output window, operand 0']
    #allocation3 [shape = 's32[2]{0}', space=sflag, size = 0x8, scoped, tag = 'scoped memory for export_model_forward.1']
    #allocation4 [shape = 'u8[1024]{0}', space=vmem, size = 0x400, scoped, tag = 'output window, operand 1']
    #allocation5 [shape = 's32[2]{0}', space=sflag, size = 0x8, scoped, tag = 'scoped memory for export_model_forward.1']
    %10 = vsyncpa [#allocation3], 0
    %s11 = scalar_lea.sflag [#allocation3], 1
    %12 = vsyncpa %s11, 0
    %13 = vsyncpa [#allocation5], 0
    %s14 = scalar_lea.sflag [#allocation5], 1
    %15 = vsyncpa %s14, 0
    loop: start=0, step=1, limit=4
    $region2: #{export_model_forward.1} parent=1 // loop_pre_header
      _
    $region3: #{export_model_forward.1} parent=1 // loop_header
      %s17 = sphi 0, %s21
      %p18 = scmp.ge.s32.totalorder %s17, 4
      %s24 = sphi 0, %s36
      %s25 = sphi 0, %s32
      %s26 = sphi 0, %s24
      %s27 = sphi 0, %s25
      %s28 = sphi 0, %s26
      %s29 = sphi 0, %s27
      %s41 = sphi 0, %s43
      %s44 = sphi 0, %s41
      %s45 = sphi 0, %s44
      %s61 = sphi 0, %s45
      %s65 = sphi 0, %s65
      %s67 = sphi 0, %s65
      %s68 = sphi 0, %s67
      %s82 = sphi 0, %s68
      %s86 = sphi 0, %s86
      %s88 = sphi 0, %s86
      %s89 = sphi 0, %s88
      %s103 = sphi 0, %s89
      %s111 = sphi 0, %s113
      %s114 = sphi 0, %s111
      %s115 = sphi 0, %s114
      %s131 = sphi 0, %s115
      %s139 = sphi 0, %s141
      %s142 = sphi 0, %s139
      %s143 = sphi 0, %s142
      %s159 = sphi 0, %s143
    $region4: #{export_model_forward.1} parent=1 // loop_header_branch
      %20 = sbr.rel (%p18) target = $region8
    $region5: #{export_model_forward.1} parent=1 // loop_body
      %s22 = ssub.s32 %s17, 1
      %s23 = ssub.s32 %s17, 2
      %s30 = sadd.s32 1, %s25
      %p31 = scmp.ge.s32.totalorder %s30, 1
      %s32 = scalar_select %p31, 0, %s30
      %s33 = sadd.s32 1, %s24
      %s34 = scalar_select %p31, %s33, %s24
      %p35 = scmp.ge.s32.totalorder %s34, 2
      %s36 = scalar_select %p35, 0, %s34
      %s37 = ssub.s32 %s24, %s36
      %s38 = ssub.s32 %s25, %s32
      %s39 = sor.u32 %s37, %s38
      %p40 = scmp.eq.s32.totalorder %s39, 0
      %s42 = sadd.s32 %s41, 1
      %s43 = scalar_select %p40, %s41, %s42
      %p46 = pneg %p40
      %p47 = scmp.eq.s32.totalorder %s17, 1
      %p48 = por %p46, %p47
      %p49 = scmp.ne.s32.totalorder %s41, %s44
      %p50 = scmp.eq.s32.totalorder %s17, 0
      %p51 = por %p49, %p50
      %p52 = scmp.ne.s32.totalorder %s41, %s44
      %p53 = scmp.eq.s32.totalorder %s22, 1
      %p54 = por %p52, %p53
      %p55 = scmp.ne.s32.totalorder %s44, %s45
      %p56 = scmp.eq.s32.totalorder %s22, 0
      %p57 = por %p55, %p56
      %p58 = scmp.ne.s32.totalorder %s44, %s45
      %p59 = scmp.eq.s32.totalorder %s23, 1
      %p60 = por %p58, %p59
      %p62 = scmp.ne.s32.totalorder %s45, %s61
      %p63 = scmp.eq.s32.totalorder %s23, 0
      %p64 = por %p62, %p63
      %s66 = sadd.s32 %s65, 1
      %p69 = scmp.eq.s32.totalorder %s17, 1
      %p70 = scmp.ne.s32.totalorder %s65, %s67
      %p71 = scmp.eq.s32.totalorder %s17, 0
      %p72 = por %p70, %p71
      %p73 = scmp.ne.s32.totalorder %s65, %s67
      %p74 = scmp.eq.s32.totalorder %s22, 1
      %p75 = por %p73, %p74
      %p76 = scmp.ne.s32.totalorder %s67, %s68
      %p77 = scmp.eq.s32.totalorder %s22, 0
      %p78 = por %p76, %p77
      %p79 = scmp.ne.s32.totalorder %s67, %s68
      %p80 = scmp.eq.s32.totalorder %s23, 1
      %p81 = por %p79, %p80
      %p83 = scmp.ne.s32.totalorder %s68, %s82
      %p84 = scmp.eq.s32.totalorder %s23, 0
      %p85 = por %p83, %p84
      %s87 = sadd.s32 %s86, 1
      %p90 = scmp.eq.s32.totalorder %s17, 1
      %p91 = scmp.ne.s32.totalorder %s86, %s88
      %p92 = scmp.eq.s32.totalorder %s17, 0
      %p93 = por %p91, %p92
      %p94 = scmp.ne.s32.totalorder %s86, %s88
      %p95 = scmp.eq.s32.totalorder %s22, 1
      %p96 = por %p94, %p95
      %p97 = scmp.ne.s32.totalorder %s88, %s89
      %p98 = scmp.eq.s32.totalorder %s22, 0
      %p99 = por %p97, %p98
      %p100 = scmp.ne.s32.totalorder %s88, %s89
      %p101 = scmp.eq.s32.totalorder %s23, 1
      %p102 = por %p100, %p101
      %p104 = scmp.ne.s32.totalorder %s89, %s103
      %p105 = scmp.eq.s32.totalorder %s23, 0
      %p106 = por %p104, %p105
      %s107 = ssub.s32 %s24, %s36
      %s108 = ssub.s32 %s25, %s32
      %s109 = sor.u32 %s107, %s108
      %p110 = scmp.eq.s32.totalorder %s109, 0
      %s112 = sadd.s32 %s111, 1
      %s113 = scalar_select %p110, %s111, %s112
      %p116 = pneg %p110
      %p117 = scmp.eq.s32.totalorder %s17, 1
      %p118 = por %p116, %p117
      %p119 = scmp.ne.s32.totalorder %s111, %s114
      %p120 = scmp.eq.s32.totalorder %s17, 0
      %p121 = por %p119, %p120
      %p122 = scmp.ne.s32.totalorder %s111, %s114
      %p123 = scmp.eq.s32.totalorder %s22, 1
      %p124 = por %p122, %p123
      %p125 = scmp.ne.s32.totalorder %s114, %s115
      %p126 = scmp.eq.s32.totalorder %s22, 0
      %p127 = por %p125, %p126
      %p128 = scmp.ne.s32.totalorder %s114, %s115
      %p129 = scmp.eq.s32.totalorder %s23, 1
      %p130 = por %p128, %p129
      %p132 = scmp.ne.s32.totalorder %s115, %s131
      %p133 = scmp.eq.s32.totalorder %s23, 0
      %p134 = por %p132, %p133
      %s135 = ssub.s32 %s24, %s36
      %s136 = ssub.s32 %s25, %s32
      %s137 = sor.u32 %s135, %s136
      %p138 = scmp.eq.s32.totalorder %s137, 0
      %s140 = sadd.s32 %s139, 1
      %s141 = scalar_select %p138, %s139, %s140
      %p144 = pneg %p138
      %p145 = scmp.eq.s32.totalorder %s17, 1
      %p146 = por %p144, %p145
      %p147 = scmp.ne.s32.totalorder %s139, %s142
      %p148 = scmp.eq.s32.totalorder %s17, 0
      %p149 = por %p147, %p148
      %p150 = scmp.ne.s32.totalorder %s139, %s142
      %p151 = scmp.eq.s32.totalorder %s22, 1
      %p152 = por %p150, %p151
      %p153 = scmp.ne.s32.totalorder %s142, %s143
      %p154 = scmp.eq.s32.totalorder %s22, 0
      %p155 = por %p153, %p154
      %p156 = scmp.ne.s32.totalorder %s142, %s143
      %p157 = scmp.eq.s32.totalorder %s23, 1
      %p158 = por %p156, %p157
      %p160 = scmp.ne.s32.totalorder %s143, %s159
      %p161 = scmp.eq.s32.totalorder %s23, 0
      %p162 = por %p160, %p161
      %p163 = scmp.le.s32.totalorder 1, %s17
      %p164 = scmp.lt.s32.totalorder %s17, 3
      %p165 = pnand %p163, %p164
      %p166 = pneg %p165
      // Predicated region
      $region9: #{export_model_forward.1} parent=5 // pred_check
        _
      $region10: #{export_model_forward.1} parent=5 // pred_check_branch
        %168 = sbr.rel (%p165) target = $region12
      $region11: #{export_model_forward.1} parent=5 // pred_region
        %s169 = ssub.s32 %s17, 1
        // Predicated region
        $region13: #{export_model_forward.1} parent=11 // pred_check
          %p170 = pneg %p78
        $region14: #{export_model_forward.1} parent=11 // pred_check_branch
          %172 = sbr.rel (%p170) target = $region16
        $region15: #{export_model_forward.1} parent=11 // pred_region
          _
        $region16: #{export_model_forward.1} parent=11 // pred_fallthru
          _
        // Predicated region
        $region17: #{export_model_forward.1} parent=11 // pred_check
          %p173 = pneg %p99
        $region18: #{export_model_forward.1} parent=11 // pred_check_branch
          %175 = sbr.rel (%p173) target = $region20
        $region19: #{export_model_forward.1} parent=11 // pred_region
          _
        $region20: #{export_model_forward.1} parent=11 // pred_fallthru
          _
      $region12: #{export_model_forward.1} parent=5 // pred_fallthru
        _
      %p176 = scmp.lt.s32.totalorder %s17, 2
      // Predicated region
      $region21: #{export_model_forward.1} parent=5 // pred_check
        %p177 = pneg %p176
      $region22: #{export_model_forward.1} parent=5 // pred_check_branch
        %179 = sbr.rel (%p177) target = $region24
      $region23: #{export_model_forward.1} parent=5 // pred_region
        // Predicated region
        $region25: #{export_model_forward.1} parent=23 // pred_check
          %p180 = pneg %p51
        $region26: #{export_model_forward.1} parent=23 // pred_check_branch
          %182 = sbr.rel (%p180) target = $region28
        $region27: #{export_model_forward.1} parent=23 // pred_region
          %p183 = scmp.lt.s32.totalorder %s24, 1
          %s184 = scalar_select %p183, %s24, 1
          %p185 = scmp.lt.s32.totalorder %s25, 0
          %s186 = scalar_select %p185, %s25, 0
          %s187 = smul.addr %s184, 8
          %s188 = sadd.s32 %s186, %s187
          %s189 = smul.addr %s188, 8
          %s190 = scalar_lea.vmem %s0, %s189
        $region28: #{export_model_forward.1} parent=23 // pred_fallthru
          _
      $region24: #{export_model_forward.1} parent=5 // pred_fallthru
        _
      %p191 = scmp.le.s32.totalorder 1, %s17
      %p192 = scmp.lt.s32.totalorder %s17, 3
      %p193 = pnand %p191, %p192
      %p194 = pneg %p193
      // Predicated region
      $region29: #{export_model_forward.1} parent=5 // pred_check
        _
      $region30: #{export_model_forward.1} parent=5 // pred_check_branch
        %196 = sbr.rel (%p193) target = $region32
      $region31: #{export_model_forward.1} parent=5 // pred_region
        %s197 = ssub.s32 %s17, 1
        %p198 = scmp.lt.s32.totalorder %s26, 1
        %s199 = scalar_select %p198, %s26, 1
        %p200 = scmp.lt.s32.totalorder %s27, 0
        %s201 = scalar_select %p200, %s27, 0
        %s202 = smul.addr %s199, 8
        %s203 = sadd.s32 %s201, %s202
        %s204 = smul.addr %s203, 8
        %s205 = scalar_lea.vmem %s0, %s204
        %p206 = pneg %p57
        %p207 = pneg %p54
        %p208 = pneg %p78
        %p209 = pneg %p75
        %p210 = pneg %p99
        %p211 = pneg %p96
        %p212 = pneg %p127
        %p213 = pneg %p124
        %s214 = sand.u32 %s114, 1
        %s215 = scalar_lea.sflag [#allocation3], %s214
        %s216 = sand.u32 %s114, 1
        %s217 = scalar_lea.vmem [#allocation2], %s216
        %p218 = pneg %p155
        %p219 = pneg %p152
        %s220 = sand.u32 %s142, 1
        %s221 = scalar_lea.sflag [#allocation5], %s220
        %s222 = sand.u32 %s142, 1
        %s223 = scalar_lea.vmem [#allocation4], %s222
        %p224 = scmp.lt.s32.totalorder %s26, 1
        %s225 = scalar_select %p224, %s26, 1
        %p226 = scmp.lt.s32.totalorder %s27, 0
        %s227 = scalar_select %p226, %s27, 0
        %s228 = smul.addr %s225, 8
        %s229 = sadd.s32 %s227, %s228
        %s230 = smul.addr %s229, 8
        %s231 = scalar_lea.vmem %s0, %s230
        %v233 = vld [vmem:[%s231] sm:$0xff]
        %v234 = vld [vmem:[%s231 + $0x8] sm:$0xff]
        %v235 = vld [vmem:[%s231 + $0x10] sm:$0xff]
        %v236 = vld [vmem:[%s231 + $0x18] sm:$0xff]
        %v237 = vld [vmem:[%s231 + $0x20] sm:$0xff]
        %v238 = vld [vmem:[%s231 + $0x28] sm:$0xff]
        %v239 = vld [vmem:[%s231 + $0x30] sm:$0xff]
        %v240 = vld [vmem:[%s231 + $0x38] sm:$0xff]
        %v241 = vpack.c.bf16 %v234, %v233
        %v242 = vpack.c.bf16 %v236, %v235
        %v243 = vpack.c.bf16 %v238, %v237
        %v244 = vpack.c.bf16 %v240, %v239
        %v245 = vld [vmem:[%s1] sm:$0xf]
        %v246 = vld [vmem:[%s1 + $0x4] sm:$0xf]
        %v247 = vld [vmem:[%s1 + $0x8] sm:$0xf]
        %v248 = vld [vmem:[%s1 + $0xc] sm:$0xf]
        %v249 = vld [vmem:[%s1 + $0x10] sm:$0xf]
        %v250 = vld [vmem:[%s1 + $0x14] sm:$0xf]
        %v251 = vld [vmem:[%s1 + $0x18] sm:$0xf]
        %v252 = vld [vmem:[%s1 + $0x1c] sm:$0xf]
        %v253 = vld [vmem:[%s1 + $0x20] sm:$0xf]
        %v254 = vld [vmem:[%s1 + $0x24] sm:$0xf]
        %v255 = vld [vmem:[%s1 + $0x28] sm:$0xf]
        %v256 = vld [vmem:[%s1 + $0x2c] sm:$0xf]
        %v257 = vld [vmem:[%s1 + $0x30] sm:$0xf]
        %v258 = vld [vmem:[%s1 + $0x34] sm:$0xf]
        %v259 = vld [vmem:[%s1 + $0x38] sm:$0xf]
        %v260 = vld [vmem:[%s1 + $0x3c] sm:$0xf]
        %v261 = vld [vmem:[%s2] sm:$0xff]
        %v262 = vld [vmem:[%s2 + $0x8] sm:$0xff]
        %v263 = vld [vmem:[%s2 + $0x10] sm:$0xff]
        %v264 = vld [vmem:[%s2 + $0x18] sm:$0xff]
        %v265 = vld [vmem:[%s2 + $0x20] sm:$0xff]
        %v266 = vld [vmem:[%s2 + $0x28] sm:$0xff]
        %v267 = vld [vmem:[%s2 + $0x30] sm:$0xff]
        %v268 = vld [vmem:[%s2 + $0x38] sm:$0xff]
        %v269 = vld [vmem:[%s2 + $0x40] sm:$0xff]
        %v270 = vld [vmem:[%s2 + $0x48] sm:$0xff]
        %v271 = vld [vmem:[%s2 + $0x50] sm:$0xff]
        %v272 = vld [vmem:[%s2 + $0x58] sm:$0xff]
        %v273 = vld [vmem:[%s2 + $0x60] sm:$0xff]
        %v274 = vld [vmem:[%s2 + $0x68] sm:$0xff]
        %v275 = vld [vmem:[%s2 + $0x70] sm:$0xff]
        %v276 = vld [vmem:[%s2 + $0x78] sm:$0xff]
        %278 = vset.pattern.permute.xlu0 0
        %279 = vperm.xlu0 %278, %v261
        %v280 = vpop.permute.xlu0 %279
        %283 = vset.pattern.permute.xlu0 0
        %284 = vperm.xlu0 %283, %v262
        %v285 = vpop.permute.xlu0 %284
        %288 = vset.pattern.permute.xlu0 0
        %289 = vperm.xlu0 %288, %v263
        %v290 = vpop.permute.xlu0 %289
        %293 = vset.pattern.permute.xlu0 0
        %294 = vperm.xlu0 %293, %v264
        %v295 = vpop.permute.xlu0 %294
        %298 = vset.pattern.permute.xlu0 0
        %299 = vperm.xlu0 %298, %v265
        %v300 = vpop.permute.xlu0 %299
        %303 = vset.pattern.permute.xlu0 0
        %304 = vperm.xlu0 %303, %v266
        %v305 = vpop.permute.xlu0 %304
        %308 = vset.pattern.permute.xlu0 0
        %309 = vperm.xlu0 %308, %v267
        %v310 = vpop.permute.xlu0 %309
        %313 = vset.pattern.permute.xlu0 0
        %314 = vperm.xlu0 %313, %v268
        %v315 = vpop.permute.xlu0 %314
        %318 = vset.pattern.permute.xlu0 0
        %319 = vperm.xlu0 %318, %v269
        %v320 = vpop.permute.xlu0 %319
        %323 = vset.pattern.permute.xlu0 0
        %324 = vperm.xlu0 %323, %v270
        %v325 = vpop.permute.xlu0 %324
        %328 = vset.pattern.permute.xlu0 0
        %329 = vperm.xlu0 %328, %v271
        %v330 = vpop.permute.xlu0 %329
        %333 = vset.pattern.permute.xlu0 0
        %334 = vperm.xlu0 %333, %v272
        %v335 = vpop.permute.xlu0 %334
        %338 = vset.pattern.permute.xlu0 0
        %339 = vperm.xlu0 %338, %v273
        %v340 = vpop.permute.xlu0 %339
        %343 = vset.pattern.permute.xlu0 0
        %344 = vperm.xlu0 %343, %v274
        %v345 = vpop.permute.xlu0 %344
        %348 = vset.pattern.permute.xlu0 0
        %349 = vperm.xlu0 %348, %v275
        %v350 = vpop.permute.xlu0 %349
        %353 = vset.pattern.permute.xlu0 0
        %354 = vperm.xlu0 %353, %v276
        %v355 = vpop.permute.xlu0 %354
        %v373 = vunpack.c.l.b16 %v245
        %v374 = vunpack.c.l.b16 %v246
        %v375 = vunpack.c.l.b16 %v247
        %v376 = vunpack.c.l.b16 %v248
        %v377 = vunpack.c.l.b16 %v249
        %v378 = vunpack.c.l.b16 %v250
        %v379 = vunpack.c.l.b16 %v251
        %v380 = vunpack.c.l.b16 %v252
        %v381 = vunpack.c.l.b16 %v253
        %v382 = vunpack.c.l.b16 %v254
        %v383 = vunpack.c.l.b16 %v255
        %v384 = vunpack.c.l.b16 %v256
        %v385 = vunpack.c.l.b16 %v257
        %v386 = vunpack.c.l.b16 %v258
        %v387 = vunpack.c.l.b16 %v259
        %v388 = vunpack.c.l.b16 %v260
        %v389 = vpack.c.b16 %v374, %v373
        %v390 = vpack.c.b16 %v376, %v375
        %v391 = vpack.c.b16 %v378, %v377
        %v392 = vpack.c.b16 %v380, %v379
        %v393 = vpack.c.b16 %v382, %v381
        %v394 = vpack.c.b16 %v384, %v383
        %v395 = vpack.c.b16 %v386, %v385
        %v396 = vpack.c.b16 %v388, %v387
        %vm397 = vcmask 523264
        %v399 = vsel %vm397, %v389, 0
        %v402 = vsel %vm397, %v390, 0
        %v405 = vsel %vm397, %v391, 0
        %v408 = vsel %vm397, %v392, 0
        %v411 = vsel %vm397, %v393, 0
        %v414 = vsel %vm397, %v394, 0
        %v417 = vsel %vm397, %v395, 0
        %v420 = vsel %vm397, %v396, 0
        %422 = vmatprep.subr.bf16.mxu0 0
        %423 = vmatpush1.bf16.msra.mxu0 %v241
        %424 = vmatprep.subr.bf16.mxu0 0
        %425 = vmatpush1.bf16.msra.mxu0 %v242
        %426 = vmatprep.subr.bf16.mxu0 0
        %427 = vmatpush1.bf16.msra.mxu0 %v243
        %428 = vmatprep.subr.bf16.mxu0 0
        %429 = vmatpush1.bf16.msra.mxu0 %v244
        %430 = vmatprep.subr.bf16.mxu0 0
        %431 = vmatpush1.bf16.msra.mxu0 0
        %432 = vmatprep.subr.bf16.mxu0 0
        %433 = vmatpush1.bf16.msra.mxu0 0
        %434 = vmatprep.subr.bf16.mxu0 0
        %435 = vmatpush1.bf16.msra.mxu0 0
        %436 = vmatprep.subr.bf16.mxu0 0
        %437 = vmatpush1.bf16.msra.mxu0 0
        %438 = vmatprep.subr.bf16.mxu0 0
        %439 = vmatpush1.bf16.msra.mxu0 0
        %440 = vmatprep.subr.bf16.mxu0 0
        %441 = vmatpush1.bf16.msra.mxu0 0
        %442 = vmatprep.subr.bf16.mxu0 0
        %443 = vmatpush1.bf16.msra.mxu0 0
        %444 = vmatprep.subr.bf16.mxu0 0
        %445 = vmatpush1.bf16.msra.mxu0 0
        %446 = vmatprep.subr.bf16.mxu0 0
        %447 = vmatpush1.bf16.msra.mxu0 0
        %448 = vmatprep.subr.bf16.mxu0 0
        %449 = vmatpush1.bf16.msra.mxu0 0
        %450 = vmatprep.subr.bf16.mxu0 0
        %451 = vmatpush1.bf16.msra.mxu0 0
        %452 = vmatprep.subr.bf16.mxu0 0
        %453 = vmatpush1.bf16.msra.mxu0 0
        %454 = vmatprep.mubr.bf16.mxu0 0
        %455 = vmatmul.mubr.bf16.gmra.mrb[0].mxu0 %v399
        %v456 = vpop.f32.mrb[0].mxu0
        %v457 = vadd.f32 %v280, %v456
        %v458 = vpop.f32.mrb[0].mxu0
        %v459 = vpop.f32.mrb[0].mxu0
        %v460 = vadd.f32 %v285, %v459
        %v461 = vpop.f32.mrb[0].mxu0
        %462 = vmatprep.mubr.bf16.mxu0 0
        %463 = vmatmul.mubr.bf16.gmra.mrb[0].mxu0 %v402
        %v464 = vpop.f32.mrb[0].mxu0
        %v465 = vadd.f32 %v290, %v464
        %v466 = vpop.f32.mrb[0].mxu0
        %v467 = vpop.f32.mrb[0].mxu0
        %v468 = vadd.f32 %v295, %v467
        %v469 = vpop.f32.mrb[0].mxu0
        %470 = vmatprep.mubr.bf16.mxu0 0
        %471 = vmatmul.mubr.bf16.gmra.mrb[0].mxu0 %v405
        %v472 = vpop.f32.mrb[0].mxu0
        %v473 = vadd.f32 %v300, %v472
        %v474 = vpop.f32.mrb[0].mxu0
        %v475 = vpop.f32.mrb[0].mxu0
        %v476 = vadd.f32 %v305, %v475
        %v477 = vpop.f32.mrb[0].mxu0
        %478 = vmatprep.mubr.bf16.mxu0 0
        %479 = vmatmul.mubr.bf16.gmra.mrb[0].mxu0 %v408
        %v480 = vpop.f32.mrb[0].mxu0
        %v481 = vadd.f32 %v310, %v480
        %v482 = vpop.f32.mrb[0].mxu0
        %v483 = vpop.f32.mrb[0].mxu0
        %v484 = vadd.f32 %v315, %v483
        %v485 = vpop.f32.mrb[0].mxu0
        %486 = vmatprep.mubr.bf16.mxu0 0
        %487 = vmatmul.mubr.bf16.gmra.mrb[0].mxu0 %v411
        %v488 = vpop.f32.mrb[0].mxu0
        %v489 = vadd.f32 %v320, %v488
        %v490 = vpop.f32.mrb[0].mxu0
        %v491 = vpop.f32.mrb[0].mxu0
        %v492 = vadd.f32 %v325, %v491
        %v493 = vpop.f32.mrb[0].mxu0
        %494 = vmatprep.mubr.bf16.mxu0 0
        %495 = vmatmul.mubr.bf16.gmra.mrb[0].mxu0 %v414
        %v496 = vpop.f32.mrb[0].mxu0
        %v497 = vadd.f32 %v330, %v496
        %v498 = vpop.f32.mrb[0].mxu0
        %v499 = vpop.f32.mrb[0].mxu0
        %v500 = vadd.f32 %v335, %v499
        %v501 = vpop.f32.mrb[0].mxu0
        %502 = vmatprep.mubr.bf16.mxu0 0
        %503 = vmatmul.mubr.bf16.gmra.mrb[0].mxu0 %v417
        %v504 = vpop.f32.mrb[0].mxu0
        %v505 = vadd.f32 %v340, %v504
        %v506 = vpop.f32.mrb[0].mxu0
        %v507 = vpop.f32.mrb[0].mxu0
        %v508 = vadd.f32 %v345, %v507
        %v509 = vpop.f32.mrb[0].mxu0
        %510 = vmatprep.mubr.bf16.mxu0 0
        %511 = vmatmul.mubr.bf16.gmra.mrb[0].mxu0 %v420
        %v512 = vpop.f32.mrb[0].mxu0
        %v513 = vadd.f32 %v350, %v512
        %v514 = vpop.f32.mrb[0].mxu0
        %v515 = vpop.f32.mrb[0].mxu0
        %v516 = vadd.f32 %v355, %v515
        %v517 = vpop.f32.mrb[0].mxu0
        %518 = vdwg.mxu0
        %v519 = vmax.f32 %v457, %v473
        %v520 = vmax.f32 %v460, %v476
        %v521 = vmax.f32 %v465, %v481
        %v522 = vmax.f32 %v468, %v484
        %v523 = vmax.f32 %v519, %v489
        %v524 = vmax.f32 %v520, %v492
        %v525 = vmax.f32 %v521, %v497
        %v526 = vmax.f32 %v522, %v500
        %v527 = vmax.f32 %v523, %v505
        %v528 = vmax.f32 %v524, %v508
        %v529 = vmax.f32 %v525, %v513
        %v530 = vmax.f32 %v526, %v516
        %v531 = vmax.f32 %v527, %v528
        %v532 = vmax.f32 %v529, %v530
        %v533 = vmax.f32 %v531, %v532
        %v534 = vrot.slane %v533, 4
        %v535 = vmax.f32 %v533, %v534
        %v536 = vrot.slane %v535, 2
        %v537 = vmax.f32 %v535, %v536
        %v538 = vrot.slane %v537, 1
        %v539 = vmax.f32 %v537, %v538
        %v540 = vsub.f32 %v457, %v539
        %v541 = vsub.f32 %v460, %v539
        %v542 = vsub.f32 %v465, %v539
        %v543 = vsub.f32 %v468, %v539
        %v544 = vsub.f32 %v473, %v539
        %v545 = vsub.f32 %v476, %v539
        %v546 = vsub.f32 %v481, %v539
        %v547 = vsub.f32 %v484, %v539
        %v548 = vsub.f32 %v489, %v539
        %v549 = vsub.f32 %v492, %v539
        %v550 = vsub.f32 %v497, %v539
        %v551 = vsub.f32 %v500, %v539
        %v552 = vsub.f32 %v505, %v539
        %v553 = vsub.f32 %v508, %v539
        %v554 = vsub.f32 %v513, %v539
        %v555 = vsub.f32 %v516, %v539
        %v556 = vmul.f32 %v540, 1.442695
        %v557 = vpow.pop %v556
        %v558 = vmul.f32 %v541, 1.442695
        %v559 = vpow.pop %v558
        %v560 = vmul.f32 %v542, 1.442695
        %v561 = vpow.pop %v560
        %v562 = vmul.f32 %v543, 1.442695
        %v563 = vpow.pop %v562
        %v564 = vmul.f32 %v544, 1.442695
        %v565 = vpow.pop %v564
        %v566 = vmul.f32 %v545, 1.442695
        %v567 = vpow.pop %v566
        %v568 = vmul.f32 %v546, 1.442695
        %v569 = vpow.pop %v568
        %v570 = vmul.f32 %v547, 1.442695
        %v571 = vpow.pop %v570
        %v572 = vmul.f32 %v548, 1.442695
        %v573 = vpow.pop %v572
        %v574 = vmul.f32 %v549, 1.442695
        %v575 = vpow.pop %v574
        %v576 = vmul.f32 %v550, 1.442695
        %v577 = vpow.pop %v576
        %v578 = vmul.f32 %v551, 1.442695
        %v579 = vpow.pop %v578
        %v580 = vmul.f32 %v552, 1.442695
        %v581 = vpow.pop %v580
        %v582 = vmul.f32 %v553, 1.442695
        %v583 = vpow.pop %v582
        %v584 = vmul.f32 %v554, 1.442695
        %v585 = vpow.pop %v584
        %v586 = vmul.f32 %v555, 1.442695
        %v587 = vpow.pop %v586
        %v588 = vadd.f32 %v557, %v559
        %v589 = vadd.f32 %v588, %v561
        %v590 = vadd.f32 %v589, %v563
        %v591 = vadd.f32 %v590, %v565
        %v592 = vadd.f32 %v591, %v567
        %v593 = vadd.f32 %v592, %v569
        %v594 = vadd.f32 %v593, %v571
        %v595 = vadd.f32 %v594, %v573
        %v596 = vadd.f32 %v595, %v575
        %v597 = vadd.f32 %v596, %v577
        %v598 = vadd.f32 %v597, %v579
        %v599 = vadd.f32 %v598, %v581
        %v600 = vadd.f32 %v599, %v583
        %v601 = vadd.f32 %v600, %v585
        %v602 = vadd.f32 %v601, %v587
        %v603 = vrot.slane %v602, 4
        %v604 = vadd.f32 %v602, %v603
        %v605 = vrot.slane %v604, 2
        %v606 = vadd.f32 %v604, %v605
        %v607 = vrot.slane %v606, 1
        %v608 = vadd.f32 %v606, %v607
        %v609 = vrcp.pop %v608
        %610 = vst [vmem:[%s223] sm:$0x1] %v609
        %v611 = vlaneseq
        %v612 = vshrl.u32 %v611, 7
        %v613 = vadd.s32 %v612, 8
        %v614 = vadd.s32 %v612, 16
        %v615 = vadd.s32 %v612, 24
        %v616 = vadd.s32 %v612, 32
        %v617 = vadd.s32 %v612, 40
        %v618 = vadd.s32 %v612, 48
        %v619 = vadd.s32 %v612, 56
        %v620 = vadd.s32 %v612, 64
        %v621 = vadd.s32 %v612, 72
        %v622 = vadd.s32 %v612, 80
        %v623 = vadd.s32 %v612, 88
        %v624 = vadd.s32 %v612, 96
        %v625 = vadd.s32 %v612, 104
        %v626 = vadd.s32 %v612, 112
        %v627 = vadd.s32 %v612, 120
        %vm628 = vcmp.eq.f32.partialorder %v457, %v539
        %vm629 = vcmp.eq.f32.partialorder %v460, %v539
        %vm630 = vcmp.eq.f32.partialorder %v465, %v539
        %vm631 = vcmp.eq.f32.partialorder %v468, %v539
        %vm632 = vcmp.eq.f32.partialorder %v473, %v539
        %vm633 = vcmp.eq.f32.partialorder %v476, %v539
        %vm634 = vcmp.eq.f32.partialorder %v481, %v539
        %vm635 = vcmp.eq.f32.partialorder %v484, %v539
        %vm636 = vcmp.eq.f32.partialorder %v489, %v539
        %vm637 = vcmp.eq.f32.partialorder %v492, %v539
        %vm638 = vcmp.eq.f32.partialorder %v497, %v539
        %vm639 = vcmp.eq.f32.partialorder %v500, %v539
        %vm640 = vcmp.eq.f32.partialorder %v505, %v539
        %vm641 = vcmp.eq.f32.partialorder %v508, %v539
        %vm642 = vcmp.eq.f32.partialorder %v513, %v539
        %vm643 = vcmp.eq.f32.partialorder %v516, %v539
        %v644 = vsel %vm628, %v612, 128
        %v645 = vsel %vm629, %v613, 128
        %v646 = vsel %vm630, %v614, 128
        %v647 = vsel %vm631, %v615, 128
        %v648 = vsel %vm632, %v616, 128
        %v649 = vsel %vm633, %v617, 128
        %v650 = vsel %vm634, %v618, 128
        %v651 = vsel %vm635, %v619, 128
        %v652 = vsel %vm636, %v620, 128
        %v653 = vsel %vm637, %v621, 128
        %v654 = vsel %vm638, %v622, 128
        %v655 = vsel %vm639, %v623, 128
        %v656 = vsel %vm640, %v624, 128
        %v657 = vsel %vm641, %v625, 128
        %v658 = vsel %vm642, %v626, 128
        %v659 = vsel %vm643, %v627, 128
        %vm660 = vcmp.lt.s32.totalorder %v644, %v648
        %v661 = vsel %vm660, %v644, %v648
        %vm662 = vcmp.lt.s32.totalorder %v645, %v649
        %v663 = vsel %vm662, %v645, %v649
        %vm664 = vcmp.lt.s32.totalorder %v646, %v650
        %v665 = vsel %vm664, %v646, %v650
        %vm666 = vcmp.lt.s32.totalorder %v647, %v651
        %v667 = vsel %vm666, %v647, %v651
        %vm668 = vcmp.lt.s32.totalorder %v661, %v652
        %v669 = vsel %vm668, %v661, %v652
        %vm670 = vcmp.lt.s32.totalorder %v663, %v653
        %v671 = vsel %vm670, %v663, %v653
        %vm672 = vcmp.lt.s32.totalorder %v665, %v654
        %v673 = vsel %vm672, %v665, %v654
        %vm674 = vcmp.lt.s32.totalorder %v667, %v655
        %v675 = vsel %vm674, %v667, %v655
        %vm676 = vcmp.lt.s32.totalorder %v669, %v656
        %v677 = vsel %vm676, %v669, %v656
        %vm678 = vcmp.lt.s32.totalorder %v671, %v657
        %v679 = vsel %vm678, %v671, %v657
        %vm680 = vcmp.lt.s32.totalorder %v673, %v658
        %v681 = vsel %vm680, %v673, %v658
        %vm682 = vcmp.lt.s32.totalorder %v675, %v659
        %v683 = vsel %vm682, %v675, %v659
        %vm684 = vcmp.lt.s32.totalorder %v677, %v679
        %v685 = vsel %vm684, %v677, %v679
        %vm686 = vcmp.lt.s32.totalorder %v681, %v683
        %v687 = vsel %vm686, %v681, %v683
        %vm688 = vcmp.lt.s32.totalorder %v685, %v687
        %v689 = vsel %vm688, %v685, %v687
        %v690 = vrot.slane %v689, 4
        %vm691 = vcmp.lt.s32.totalorder %v689, %v690
        %v692 = vsel %vm691, %v689, %v690
        %v693 = vrot.slane %v692, 2
        %vm694 = vcmp.lt.s32.totalorder %v692, %v693
        %v695 = vsel %vm694, %v692, %v693
        %v696 = vrot.slane %v695, 1
        %vm697 = vcmp.lt.s32.totalorder %v695, %v696
        %v698 = vsel %vm697, %v695, %v696
        %699 = vst [vmem:[%s217] sm:$0x1] %v698
        %s700 = sand.u32 %s114, 1
        %s701 = scalar_lea.sflag [#allocation3], %s700
        %s702 = sand.u32 %s114, 1
        %s703 = scalar_lea.vmem [#allocation2], %s702
        %s704 = sand.u32 %s142, 1
        %s705 = scalar_lea.sflag [#allocation5], %s704
        %s706 = sand.u32 %s142, 1
        %s707 = scalar_lea.vmem [#allocation4], %s706
        // Predicated region
        $region33: #{export_model_forward.1} parent=31 // pred_check
          %p708 = pneg %p124
        $region34: #{export_model_forward.1} parent=31 // pred_check_branch
          %710 = sbr.rel (%p708) target = $region36
        $region35: #{export_model_forward.1} parent=31 // pred_region
          %s712 = ssub.s32 16, 16
          %713 = vsyncadd %s701, %s712
          %s714 = sadd.s32 %s27, %s26
          %s715 = smul.addr %s714, 16
          %s716 = scalar_lea.hbm %s3, %s715
          %s718 = sshll.u32 %s703, 4
          %s719 = int_to_ptr.vmem [resolvable:$true] %s718
          %721 = dma.vmem_to_hbm [thread:$0]  %s719, 16, %s716, %s701
        $region36: #{export_model_forward.1} parent=31 // pred_fallthru
          _
        // Predicated region
        $region37: #{export_model_forward.1} parent=31 // pred_check
          %p722 = pneg %p152
        $region38: #{export_model_forward.1} parent=31 // pred_check_branch
          %724 = sbr.rel (%p722) target = $region40
        $region39: #{export_model_forward.1} parent=31 // pred_region
          %s726 = ssub.s32 16, 16
          %727 = vsyncadd %s705, %s726
          %s728 = sadd.s32 %s27, %s26
          %s729 = smul.addr %s728, 16
          %s730 = scalar_lea.hbm %s4, %s729
          %s732 = sshll.u32 %s707, 4
          %s733 = int_to_ptr.vmem [resolvable:$true] %s732
          %735 = dma.vmem_to_hbm [thread:$0]  %s733, 16, %s730, %s705
        $region40: #{export_model_forward.1} parent=31 // pred_fallthru
          _
      $region32: #{export_model_forward.1} parent=5 // pred_fallthru
        _
      %p736 = scmp.le.s32.totalorder 2, %s17
      // Predicated region
      $region41: #{export_model_forward.1} parent=5 // pred_check
        %p737 = pneg %p736
      $region42: #{export_model_forward.1} parent=5 // pred_check_branch
        %739 = sbr.rel (%p737) target = $region44
      $region43: #{export_model_forward.1} parent=5 // pred_region
        %s740 = ssub.s32 %s17, 2
        // Predicated region
        $region45: #{export_model_forward.1} parent=43 // pred_check
          %p741 = pneg %p130
        $region46: #{export_model_forward.1} parent=43 // pred_check_branch
          %743 = sbr.rel (%p741) target = $region48
        $region47: #{export_model_forward.1} parent=43 // pred_region
          %s744 = sand.u32 %s115, 1
          %s745 = scalar_lea.sflag [#allocation3], %s744
          %s746 = sand.u32 %s115, 1
          %s747 = scalar_lea.vmem [#allocation2], %s746
          %748 = dma.done %s745, 16
        $region48: #{export_model_forward.1} parent=43 // pred_fallthru
          _
        // Predicated region
        $region49: #{export_model_forward.1} parent=43 // pred_check
          %p749 = pneg %p158
        $region50: #{export_model_forward.1} parent=43 // pred_check_branch
          %751 = sbr.rel (%p749) target = $region52
        $region51: #{export_model_forward.1} parent=43 // pred_region
          %s752 = sand.u32 %s143, 1
          %s753 = scalar_lea.sflag [#allocation5], %s752
          %s754 = sand.u32 %s143, 1
          %s755 = scalar_lea.vmem [#allocation4], %s754
          %756 = dma.done %s753, 16
        $region52: #{export_model_forward.1} parent=43 // pred_fallthru
          _
      $region44: #{export_model_forward.1} parent=5 // pred_fallthru
        _
    $region6: #{export_model_forward.1} parent=1 // loop_footer
      %s21 = sadd.s32 1, %s17
    $region7: #{export_model_forward.1} parent=1 // loop_footer_branch
      %16 = sbr.rel target = $region3
    $region8: #{export_model_forward.1} parent=1 // loop_exit
      _
    %757 = vsyncpa [#allocation3], 1
    %s758 = scalar_lea.sflag [#allocation3], 1
    %759 = vsyncpa %s758, 1
    %760 = vsyncpa [#allocation5], 1
    %s761 = scalar_lea.sflag [#allocation5], 1
    %762 = vsyncpa %s761, 1

</llo_original>
